<compile_context>
chip_gen: v6e
topology: v6e:2x2x1
jax: 0.10.0
libtpu: 0.0.40
codegen_flags: <defaults>
</compile_context>

<pallas_src>
import functools

import jax
import jax.numpy as jnp
from jax.experimental import pallas as pl
from jax.experimental.pallas import tpu as pltpu

LANE = 128   # lane width (last dim)
SUB = 8      # f32 sublane granularity
DEFAULT_BLOCK_ROWS = 8192   # 8192*128*4 B = 4 MiB per input tile


def _tpu_config():
    """Returns (block_rows_max, num_tensorcores) for the local TPU generation."""
    kind = ""
    try:
        kind = jax.devices()[0].device_kind.lower()
    except Exception:  # pragma: no cover - defensive
        pass
    # v7x exposes 2 TensorCores per device; v5e / v6e have 1.
    ncore = 2 if ("v7" in kind or "7x" in kind) else 1
    return DEFAULT_BLOCK_ROWS, ncore


def _focal_loss_kernel(alpha_ref, x_ref, t_ref, out_ref, *,
                       gamma, has_alpha, block_rows, nblocks, bpc,
                       tail_rows, needs_mask):
    p = pl.program_id(0)          # core / parallel axis
    j = pl.program_id(1)          # sequential reduction axis
    gb = p * bpc + j              # logical (unclamped) block index

    @pl.when(j == 0)
    def _():
        out_ref[...] = jnp.zeros_like(out_ref)

    x = x_ref[...].astype(jnp.float32)
    t = t_ref[...].astype(jnp.float32)
    t_pos = t > 0.5               # hard {0,1} targets

    # binary_cross_entropy(reduction='none'); PyTorch clamps each log term at -100.
    log_p = jnp.maximum(jnp.log(x), -100.0)
    log_1mp = jnp.maximum(jnp.log1p(-x), -100.0)
    ce = -jnp.where(t_pos, log_p, log_1mp)

    # 1 - pt, with pt = exp(-ce) = prob assigned to the true class (hard targets).
    one_minus_pt = jnp.where(t_pos, 1.0 - x, x)

    g = gamma
    if isinstance(g, float) and float(g).is_integer():
        g = int(g)
    if isinstance(g, int) and 0 <= g <= 8:
        if g == 0:
            w = jnp.ones_like(one_minus_pt)
        else:
            w = one_minus_pt
            for _ in range(g - 1):          # repeated multiply; no pow/exp/log
                w = w * one_minus_pt
    else:
        w = one_minus_pt ** g               # non-integer gamma: fall back to pow

    if has_alpha:
        alpha_t = jnp.where(t_pos, alpha_ref[1], alpha_ref[0])
        focal = alpha_t * (w * ce)
    else:
        focal = w * ce

    def _accumulate(vals):
        # (block_rows,128) -> (block_rows//8, 8, 128): tile-aligned split; the sum over
        # the leading axis stays on the VPU and lands directly in the resident output.
        out_ref[...] += vals.reshape(block_rows // SUB, SUB, LANE).sum(axis=0)

    if not needs_mask:
        # Grid tiles the array exactly: no masking anywhere.
        _accumulate(focal)
    else:
        # Interior blocks carry no padding: skip the mask entirely.
        @pl.when(gb < nblocks - 1)
        def _():
            _accumulate(focal)

        # Last real block (partial rows) and clamped overflow blocks (contribute 0).
        @pl.when(gb >= nblocks - 1)
        def _():
            row = jax.lax.broadcasted_iota(jnp.int32, (block_rows, 1), 0)
            valid_rows = jnp.where(gb == nblocks - 1, tail_rows, 0)
            _accumulate(jnp.where(row < valid_rows, focal, 0.0))


def _focal_values(x, t, alpha, gamma):
    """Plain-jnp per-element focal values (used only for the < 1024-elem ragged tail)."""
    x = x.astype(jnp.float32)
    t = t.astype(jnp.float32)
    t_pos = t > 0.5
    log_p = jnp.maximum(jnp.log(x), -100.0)
    log_1mp = jnp.maximum(jnp.log1p(-x), -100.0)
    ce = -jnp.where(t_pos, log_p, log_1mp)
    one_minus_pt = jnp.where(t_pos, 1.0 - x, x)
    w = one_minus_pt ** gamma
    if alpha is not None:
        a = jnp.asarray(alpha, dtype=jnp.float32)
        w = jnp.where(t_pos, a[1], a[0]) * w
    return w * ce


def focal_loss(inputs, targets, alpha=None, gamma=2, *,
               _block_rows_max=None, _ncore=None):
    """Pallas focal loss: `inputs` are probabilities in (0,1), `targets` are {0,1}."""
    n = inputs.size
    x = jnp.ravel(inputs)
    t = jnp.ravel(targets)

    cfg_rows, cfg_ncore = _tpu_config()
    block_rows_max = cfg_rows if _block_rows_max is None else _block_rows_max
    ncore = cfg_ncore if _ncore is None else _ncore

    min_tile = SUB * LANE  # 1024
    n_main = (n // min_tile) * min_tile

    # Ragged tail (< 1024 elements): plain jnp, no full-array pad/copy in the kernel path.
    tail_sum = jnp.float32(0.0)
    if n_main < n:
        tail_sum = jnp.sum(_focal_values(x[n_main:], t[n_main:], alpha, gamma))
    if n_main == 0:
        return tail_sum / jnp.float32(n)

    if n_main < n:
        x_main = jax.lax.slice(x, (0,), (n_main,))
        t_main = jax.lax.slice(t, (0,), (n_main,))
    else:
        x_main, t_main = x, t

    rows = n_main // LANE
    x_main = x_main.reshape(rows, LANE)
    t_main = t_main.reshape(rows, LANE)

    if rows > block_rows_max:
        # Keep non-full blocks 32-row aligned so f32 / bf16 / int8 sublane tiling all work.
        align = 32 if block_rows_max >= 32 else SUB
        block_rows = max(align, (block_rows_max // align) * align)
        block_rows = min(block_rows, rows)
    else:
        block_rows = rows                     # full extent: always legal
    nblocks = pl.cdiv(rows, block_rows)
    ncore_eff = max(1, min(ncore, nblocks))
    bpc = pl.cdiv(nblocks, ncore_eff)         # blocks per parallel slice
    tail_rows = rows - (nblocks - 1) * block_rows
    needs_mask = (tail_rows != block_rows) or (ncore_eff * bpc != nblocks)

    if alpha is None:
        alpha_arr = jnp.zeros((2,), dtype=jnp.float32)        # unused in kernel
    else:
        alpha_arr = jnp.asarray(alpha, dtype=jnp.float32).reshape(2)

    def in_map(p, j):
        # Clamp so overflow grid points re-read the last block; they contribute 0.
        return (jnp.minimum(p * bpc + j, nblocks - 1), 0)

    kernel = functools.partial(
        _focal_loss_kernel,
        gamma=gamma,
        has_alpha=alpha is not None,
        block_rows=block_rows,
        nblocks=nblocks,
        bpc=bpc,
        tail_rows=tail_rows,
        needs_mask=needs_mask,
    )

    if ncore_eff > 1:
        # Only core_parallel actually shards a grid axis across TensorCores (v7x).
        core_sem = getattr(pltpu, "CORE_PARALLEL", "parallel")
        dim_sem = (core_sem, "arbitrary")
    else:
        dim_sem = ("arbitrary", "arbitrary")

    partials = pl.pallas_call(
        kernel,
        out_shape=jax.ShapeDtypeStruct((ncore_eff, SUB, LANE), jnp.float32),
        grid_spec=pltpu.PrefetchScalarGridSpec(
            num_scalar_prefetch=0,
            grid=(ncore_eff, bpc),
            in_specs=[
                pl.BlockSpec(memory_space=pltpu.MemorySpace.SMEM),  # alpha pair
                pl.BlockSpec((block_rows, LANE), in_map),           # inputs tile
                pl.BlockSpec((block_rows, LANE), in_map),           # targets tile
            ],
            out_specs=pl.BlockSpec((None, SUB, LANE), lambda p, j: (p, 0, 0)),
        ),
        compiler_params=pltpu.CompilerParams(
            dimension_semantics=dim_sem,
            vmem_limit_bytes=32 * 1024 * 1024,   # lets 4 MiB tiles fit on v5e too
        ),
    )(alpha_arr, x_main, t_main)

    # Single cheap cross-lane reduction + mean, outside the hot loop.
    return (jnp.sum(partials) + tail_sum) / jnp.float32(n)


def _focal_loss_ref(inputs, targets, alpha=None, gamma=2):
    """Pure-JAX reference, faithful to the PyTorch module (exp(-CE) path)."""
    x = inputs.astype(jnp.float32)
    t = targets.astype(jnp.float32)
    ce = -(t * jnp.maximum(jnp.log(x), -100.0)
           + (1.0 - t) * jnp.maximum(jnp.log1p(-x), -100.0))
    pt = jnp.exp(-ce)
    if alpha is not None:
        a = jnp.asarray(alpha, dtype=jnp.float32)
        alpha_t = a[1] * t + a[0] * (1.0 - t)
        f = alpha_t * (1.0 - pt) ** gamma * ce
    else:
        f = (1.0 - pt) ** gamma * ce
    return jnp.mean(f)


if __name__ == "__main__":
    key = jax.random.PRNGKey(0)
    k1, k2, k3, k4, k5, k6 = jax.random.split(key, 6)

    B, C, H, W = 2, 4, 16, 16
    inputs = jax.random.uniform(k1, (B, C, H, W), jnp.float32,
                                minval=1e-4, maxval=1.0 - 1e-4)
    targets = (jax.random.uniform(k2, (B, C, H, W)) > 0.5).astype(jnp.float32)

    # case 1: module defaults (alpha=None, gamma=2)
    out = jax.block_until_ready(focal_loss(inputs, targets))
    ref = _focal_loss_ref(inputs, targets)
    assert jnp.allclose(out, ref, rtol=1e-4, atol=1e-6), (out, ref)

    # case 2: alpha weighting
    alpha = jnp.array([0.25, 0.75], jnp.float32)
    out_a = jax.block_until_ready(focal_loss(inputs, targets, alpha=alpha))
    ref_a = _focal_loss_ref(inputs, targets, alpha=alpha)
    assert jnp.allclose(out_a, ref_a, rtol=1e-4, atol=1e-6), (out_a, ref_a)

    # case 3: small block size forces multiple blocks per slice
    out_m = jax.block_until_ready(
        focal_loss(inputs, targets, alpha=alpha, _block_rows_max=8))
    assert jnp.allclose(out_m, ref_a, rtol=1e-4, atol=1e-6), (out_m, ref_a)

    # case 4: ragged n (not a multiple of 1024) exercises the jnp tail path
    ri = jax.random.uniform(k3, (2, 3, 17, 19), jnp.float32,
                            minval=1e-4, maxval=1.0 - 1e-4)
    rt = (jax.random.uniform(k4, (2, 3, 17, 19)) > 0.5).astype(jnp.float32)
    out_r = jax.block_until_ready(focal_loss(ri, rt, alpha=alpha, _block_rows_max=8))
    ref_r = _focal_loss_ref(ri, rt, alpha=alpha)
    assert jnp.allclose(out_r, ref_r, rtol=1e-4, atol=1e-6), (out_r, ref_r)

    # case 5: multi-step accumulation, odd block count (overflow block on 2-core parts)
    mi = jax.random.uniform(k5, (3, 4, 16, 16), jnp.float32,
                            minval=1e-4, maxval=1.0 - 1e-4)
    mt = (jax.random.uniform(k6, (3, 4, 16, 16)) > 0.5).astype(jnp.float32)
    out_s = jax.block_until_ready(focal_loss(mi, mt, alpha=None, _block_rows_max=8))
    ref_s = _focal_loss_ref(mi, mt, alpha=None)
    assert jnp.allclose(out_s, ref_s, rtol=1e-4, atol=1e-6), (out_s, ref_s)

    # case 6: forced 2-slice grid (exercises the parallel axis even on 1-TC chips)
    out_c = jax.block_until_ready(
        focal_loss(mi, mt, alpha=alpha, _block_rows_max=8, _ncore=2))
    ref_c = _focal_loss_ref(mi, mt, alpha=alpha)
    assert jnp.allclose(out_c, ref_c, rtol=1e-4, atol=1e-6), (out_c, ref_c)

    print("KERNEL_OK")
</pallas_src>

<mosaic_0001>
module attributes {stable_mosaic.version = 11 : i64} {
  func.func @_focal_loss_kernel(%arg0: i32, %arg1: i32, %arg2: memref<2xf32, #tpu.memory_space<smem>>, %arg3: memref<16x128xf32, #tpu.memory_space<vmem>>, %arg4: memref<16x128xf32, #tpu.memory_space<vmem>>, %arg5: memref<1x8x128xf32, #tpu.memory_space<vmem>>) attributes {dimension_semantics = [#tpu.dimension_semantics<arbitrary>, #tpu.dimension_semantics<arbitrary>], iteration_bounds = array<i64: 1, 1>, scalar_prefetch = 0 : i64, scratch_operands = 0 : i64, tpu.core_type = #tpu.core_type<tc>, window_params = [{transform_indices = @transform_0, window_bounds = array<i64: 2>}, {transform_indices = @transform_1, window_bounds = array<i64: 16, 128>}, {transform_indices = @transform_2, window_bounds = array<i64: 16, 128>}, {transform_indices = @transform_3, window_bounds = array<i64: 1, 8, 128>}]} {
    %c0_i32 = arith.constant 0 : i32
    %0 = arith.cmpi eq, %arg1, %c0_i32 : i32
    %1 = arith.extui %0 : i1 to i32
    %c0_i32_0 = arith.constant 0 : i32
    %2 = arith.cmpi ne, %1, %c0_i32_0 : i32
    scf.if %2 {
      %cst_16 = arith.constant 0.000000e+00 : f32
      %31 = vector.broadcast %cst_16 : f32 to vector<8x128xf32>
      %c0_17 = arith.constant 0 : index
      %c0_18 = arith.constant 0 : index
      %c0_19 = arith.constant 0 : index
      %32 = vector.load %arg5[%c0_17, %c0_18, %c0_19] : memref<1x8x128xf32, #tpu.memory_space<vmem>>, vector<1x8x128xf32>
      %33 = vector.shape_cast %32 : vector<1x8x128xf32> to vector<8x128xf32>
      %34 = vector.shape_cast %31 : vector<8x128xf32> to vector<1x8x128xf32>
      tpu.vector_store %arg5[%c0_17, %c0_18, %c0_19], %34 {strides = array<i32>} : memref<1x8x128xf32, #tpu.memory_space<vmem>>, vector<1x8x128xf32>,
    } else {
    }
    %c0 = arith.constant 0 : index
    %c0_1 = arith.constant 0 : index
    %3 = vector.load %arg3[%c0, %c0_1] : memref<16x128xf32, #tpu.memory_space<vmem>>, vector<16x128xf32>
    %c0_2 = arith.constant 0 : index
    %c0_3 = arith.constant 0 : index
    %4 = vector.load %arg4[%c0_2, %c0_3] : memref<16x128xf32, #tpu.memory_space<vmem>>, vector<16x128xf32>
    %cst = arith.constant 5.000000e-01 : f32
    %5 = vector.broadcast %cst : f32 to vector<16x128xf32>
    %6 = arith.cmpf ogt, %4, %5 : vector<16x128xf32>
    %7 = math.log %3 : vector<16x128xf32>
    %cst_4 = arith.constant -1.000000e+02 : f32
    %8 = vector.broadcast %cst_4 : f32 to vector<16x128xf32>
    %9 = arith.maximumf %7, %8 : vector<16x128xf32>
    %cst_5 = arith.constant 0.000000e+00 : f32
    %10 = vector.broadcast %cst_5 : f32 to vector<16x128xf32>
    %11 = arith.subf %10, %3 : vector<16x128xf32>
    %12 = math.log1p %11 : vector<16x128xf32>
    %cst_6 = arith.constant -1.000000e+02 : f32
    %13 = vector.broadcast %cst_6 : f32 to vector<16x128xf32>
    %14 = arith.maximumf %12, %13 : vector<16x128xf32>
    %15 = arith.select %6, %9, %14 : vector<16x128xi1>, vector<16x128xf32>
    %cst_7 = arith.constant 0.000000e+00 : f32
    %16 = vector.broadcast %cst_7 : f32 to vector<16x128xf32>
    %17 = arith.subf %16, %15 : vector<16x128xf32>
    %cst_8 = arith.constant 1.000000e+00 : f32
    %18 = vector.broadcast %cst_8 : f32 to vector<16x128xf32>
    %19 = arith.subf %18, %3 : vector<16x128xf32>
    %20 = arith.select %6, %19, %3 : vector<16x128xi1>, vector<16x128xf32>
    %21 = arith.mulf %20, %20 : vector<16x128xf32>
    %22 = arith.mulf %21, %17 : vector<16x128xf32>
    %c0_9 = arith.constant 0 : index
    %c0_10 = arith.constant 0 : index
    %c0_11 = arith.constant 0 : index
    %23 = vector.load %arg5[%c0_9, %c0_10, %c0_11] : memref<1x8x128xf32, #tpu.memory_space<vmem>>, vector<1x8x128xf32>
    %24 = vector.shape_cast %23 : vector<1x8x128xf32> to vector<8x128xf32>
    %25 = vector.shape_cast %22 : vector<16x128xf32> to vector<2x8x128xf32>
    %cst_12 = arith.constant dense<0.000000e+00> : vector<8x128xf32>
    %26 = vector.multi_reduction <add>, %25, %cst_12 [0] : vector<2x8x128xf32> to vector<8x128xf32>
    %27 = arith.addf %24, %26 : vector<8x128xf32>
    %c0_13 = arith.constant 0 : index
    %c0_14 = arith.constant 0 : index
    %c0_15 = arith.constant 0 : index
    %28 = vector.load %arg5[%c0_13, %c0_14, %c0_15] : memref<1x8x128xf32, #tpu.memory_space<vmem>>, vector<1x8x128xf32>
    %29 = vector.shape_cast %28 : vector<1x8x128xf32> to vector<8x128xf32>
    %30 = vector.shape_cast %27 : vector<8x128xf32> to vector<1x8x128xf32>
    tpu.vector_store %arg5[%c0_13, %c0_14, %c0_15], %30 {strides = array<i32>} : memref<1x8x128xf32, #tpu.memory_space<vmem>>, vector<1x8x128xf32>,
    return
  }
  func.func @transform_0(%arg0: i32, %arg1: i32) -> i32 {
    %c0_i32 = arith.constant 0 : i32
    %c0_i32_0 = arith.constant 0 : i32
    return %c0_i32 : i32
  }
  func.func @transform_1(%arg0: i32, %arg1: i32) -> (i32, i32) {
    %c1_i32 = arith.constant 1 : i32
    %0 = arith.muli %arg0, %c1_i32 : i32
    %1 = arith.addi %0, %arg1 : i32
    %c0_i32 = arith.constant 0 : i32
    %2 = arith.minsi %1, %c0_i32 : i32
    %c0_i32_0 = arith.constant 0 : i32
    %c0_i32_1 = arith.constant 0 : i32
    return %2, %c0_i32_0 : i32, i32
  }
  func.func @transform_2(%arg0: i32, %arg1: i32) -> (i32, i32) {
    %c1_i32 = arith.constant 1 : i32
    %0 = arith.muli %arg0, %c1_i32 : i32
    %1 = arith.addi %0, %arg1 : i32
    %c0_i32 = arith.constant 0 : i32
    %2 = arith.minsi %1, %c0_i32 : i32
    %c0_i32_0 = arith.constant 0 : i32
    %c0_i32_1 = arith.constant 0 : i32
    return %2, %c0_i32_0 : i32, i32
  }
  func.func @transform_3(%arg0: i32, %arg1: i32) -> (i32, i32, i32) {
    %c0_i32 = arith.constant 0 : i32
    %c0_i32_0 = arith.constant 0 : i32
    %c0_i32_1 = arith.constant 0 : i32
    return %arg0, %c0_i32, %c0_i32_0 : i32, i32, i32
  }
}

</mosaic_0001>

<llo_original>
// kernel: tpu_custom_call.1
$region0: #{tpu_custom_call.1}
  #allocation0 [shape = 'u32[]', space=smem, size = 0x4, offset = 0x4, fixed_abs, tag = 'smem constant byte address 0x4 - core index']
  #allocation1 [shape = 'u32[144,128]{1,0:T(1,128)}', space=vmem, size = 0x12000, scoped, tag = 'internal scratch']
  %s0 = inlined_call_operand.hbm [shape: f32[2], index: 0, kind: input, shape index: {}]
  %s1 = inlined_call_operand.hbm [shape: f32[16,128], index: 1, kind: input, shape index: {}]
  %s2 = inlined_call_operand.hbm [shape: f32[16,128], index: 2, kind: input, shape index: {}]
  %s3 = inlined_call_operand.hbm [shape: f32[1,8,128], index: 3, kind: output, shape index: {}]
  %s4 = sld [smem:[#allocation0]]
  $region38: #{tpu_custom_call.1} parent=0
    _
  %s6 = ssub.s32 1, %s4
  %s7 = scalar_select 0, %s6, %s4
  $region1: #{tpu_custom_call.1} parent=0
    #allocation2 [shape = 'u8[512]{0}', space=smem, size = 0x200, scoped, tag = 'input window, operand 0, single buffered']
    #allocation3 [shape = 's32[1]{0}', space=sflag, size = 0x4, scoped, tag = 'scoped memory for tpu_custom_call.1']
    #allocation4 [shape = 's32[1]{0}', space=sflag, size = 0x4, scoped, tag = 'scoped memory for tpu_custom_call.1']
    #allocation5 [shape = 's32[1]{0}', space=sflag, size = 0x4, scoped, tag = 'scoped memory for tpu_custom_call.1']
    #allocation6 [shape = 'u8[8192]{0}', space=vmem, size = 0x2000, scoped, tag = 'input window, operand 1, single buffered']
    #allocation7 [shape = 'u8[8192]{0}', space=vmem, size = 0x2000, scoped, tag = 'input window, operand 2, single buffered']
    #allocation8 [shape = 's32[1]{0}', space=sflag, size = 0x4, scoped, tag = 'scoped memory for tpu_custom_call.1']
    #allocation9 [shape = 'u8[4096]{0}', space=vmem, size = 0x1000, scoped, tag = 'output window, operand 0, single buffered']
    %8 = vsyncpa [#allocation5], 0
    %9 = vsyncpa [#allocation3], 0
    %10 = vsyncpa [#allocation8], 0
    %11 = vsyncpa [#allocation4], 0
    // Predicated region
    $region2: #{tpu_custom_call.1} parent=1 // pred_check
      _
    $region3: #{tpu_custom_call.1} parent=1 // pred_check_branch
      %13 = sbr.rel (0) target = $region5
    $region4: #{tpu_custom_call.1} parent=1 // pred_region
      %s15 = ssub.s32 16, 16
      %16 = vsyncadd [#allocation5], %s15
      %19 = dma.hbm_to_smem %s0, 16, [#allocation2], [#allocation5]
    $region5: #{tpu_custom_call.1} parent=1 // pred_fallthru
      _
    // Predicated region
    $region6: #{tpu_custom_call.1} parent=1 // pred_check
      _
    $region7: #{tpu_custom_call.1} parent=1 // pred_check_branch
      %21 = sbr.rel (0) target = $region9
    $region8: #{tpu_custom_call.1} parent=1 // pred_region
      %s22 = sadd.s32 0, 0
      %p23 = scmp.lt.s32.totalorder %s22, 0
      %s24 = scalar_select %p23, %s22, 0
      %s25 = smul.u32 2, %s24
      %s27 = ssub.s32 256, 256
      %28 = vsyncadd [#allocation3], %s27
      %s29 = smul.addr %s25, 128
      %s30 = scalar_lea.hbm %s1, %s29
      %s31 = sshll.u32 [#allocation6], 4
      %s32 = int_to_ptr.vmem [resolvable:$true] %s31
      %37 = dma.hbm_to_vmem [thread:$0]  %s30, 256, %s32, [#allocation3], 128, 128, 8
    $region9: #{tpu_custom_call.1} parent=1 // pred_fallthru
      _
    // Predicated region
    $region10: #{tpu_custom_call.1} parent=1 // pred_check
      _
    $region11: #{tpu_custom_call.1} parent=1 // pred_check_branch
      %39 = sbr.rel (0) target = $region13
    $region12: #{tpu_custom_call.1} parent=1 // pred_region
      %s40 = sadd.s32 0, 0
      %p41 = scmp.lt.s32.totalorder %s40, 0
      %s42 = scalar_select %p41, %s40, 0
      %s43 = smul.u32 2, %s42
      %s45 = ssub.s32 256, 256
      %46 = vsyncadd [#allocation8], %s45
      %s47 = smul.addr %s43, 128
      %s48 = scalar_lea.hbm %s2, %s47
      %s49 = sshll.u32 [#allocation7], 4
      %s50 = int_to_ptr.vmem [resolvable:$true] %s49
      %55 = dma.hbm_to_vmem [thread:$0]  %s48, 256, %s50, [#allocation8], 128, 128, 8
    $region13: #{tpu_custom_call.1} parent=1 // pred_fallthru
      _
    // Predicated region
    $region14: #{tpu_custom_call.1} parent=1 // pred_check
      _
    $region15: #{tpu_custom_call.1} parent=1 // pred_check_branch
      %57 = sbr.rel (0) target = $region17
    $region16: #{tpu_custom_call.1} parent=1 // pred_region
      %58 = dma.done [#allocation5], 16
    $region17: #{tpu_custom_call.1} parent=1 // pred_fallthru
      _
    // Predicated region
    $region18: #{tpu_custom_call.1} parent=1 // pred_check
      _
    $region19: #{tpu_custom_call.1} parent=1 // pred_check_branch
      %60 = sbr.rel (0) target = $region21
    $region20: #{tpu_custom_call.1} parent=1 // pred_region
      %61 = dma.done [#allocation3], 256
    $region21: #{tpu_custom_call.1} parent=1 // pred_fallthru
      _
    // Predicated region
    $region22: #{tpu_custom_call.1} parent=1 // pred_check
      _
    $region23: #{tpu_custom_call.1} parent=1 // pred_check_branch
      %63 = sbr.rel (0) target = $region25
    $region24: #{tpu_custom_call.1} parent=1 // pred_region
      %64 = dma.done [#allocation8], 256
    $region25: #{tpu_custom_call.1} parent=1 // pred_fallthru
      _
    %65 = sfence
    %s66 = sadd.s32 0, 0
    %p67 = scmp.lt.s32.totalorder %s66, 0
    %s68 = scalar_select %p67, %s66, 0
    %s69 = smul.u32 2, %s68
    %s70 = sadd.s32 0, 0
    %p71 = scmp.lt.s32.totalorder %s70, 0
    %s72 = scalar_select %p71, %s70, 0
    %s73 = smul.u32 2, %s72
    %p74 = scmp.eq.s32.totalorder 0, 0
    // Predicated region
    $region26: #{tpu_custom_call.1} parent=1 // pred_check
      %p75 = pneg %p74
    $region27: #{tpu_custom_call.1} parent=1 // pred_check_branch
      %77 = sbr.rel (%p75) target = $region29
    $region28: #{tpu_custom_call.1} parent=1 // pred_region
      %78 = vst [vmem:[#allocation9] sm:$0xff] 0.0
    $region29: #{tpu_custom_call.1} parent=1 // pred_fallthru
      _
    %v79 = vld [vmem:[#allocation6] sm:$0xff]
    %v80 = vld [vmem:[#allocation6 + $0x8] sm:$0xff]
    %v81 = vld [vmem:[#allocation7] sm:$0xff]
    %v82 = vld [vmem:[#allocation7 + $0x8] sm:$0xff]
    %vm83 = vcmp.gt.f32.partialorder %v81, 0.5
    %vm84 = vcmp.gt.f32.partialorder %v82, 0.5
    %v85 = vlog2.pop %v79
    %v86 = vmul.f32 %v85, 0.6931472
    %v87 = vlog2.pop %v80
    %v88 = vmul.f32 %v87, 0.6931472
    %v89 = vmax.f32 %v86, -100.0
    %v90 = vmax.f32 %v88, -100.0
    %v91 = vsub.f32 0.0, %v79
    %v92 = vsub.f32 0.0, %v80
    %v93 = vadd.f32 %v91, 1.0
    %v94 = vlog2.pop %v93
    %v95 = vmul.f32 %v94, 0.6931472
    %v96 = vmul.f32 -0.5, %v91
    %v97 = vadd.f32 %v96, 1.0
    %v98 = vmul.f32 %v97, %v91
    %v99 = vand.u32 2147483647, %v91
    %vm100 = vcmp.lt.f32.partialorder %v99, 0.0004427343
    %v101 = vsel %vm100, %v98, %v95
    %v102 = vadd.f32 %v92, 1.0
    %v103 = vlog2.pop %v102
    %v104 = vmul.f32 %v103, 0.6931472
    %v105 = vmul.f32 -0.5, %v92
    %v106 = vadd.f32 %v105, 1.0
    %v107 = vmul.f32 %v106, %v92
    %v108 = vand.u32 2147483647, %v92
    %vm109 = vcmp.lt.f32.partialorder %v108, 0.0004427343
    %v110 = vsel %vm109, %v107, %v104
    %v111 = vmax.f32 %v101, -100.0
    %v112 = vmax.f32 %v110, -100.0
    %v113 = vsel %vm83, %v89, %v111
    %v114 = vsel %vm84, %v90, %v112
    %v115 = vsub.f32 0.0, %v113
    %v116 = vsub.f32 0.0, %v114
    %v117 = vsub.f32 1.0, %v79
    %v118 = vsub.f32 1.0, %v80
    %v119 = vsel %vm83, %v117, %v79
    %v120 = vsel %vm84, %v118, %v80
    %v121 = vmul.f32 %v119, %v119
    %v122 = vmul.f32 %v120, %v120
    %v123 = vmul.f32 %v121, %v115
    %v124 = vmul.f32 %v122, %v116
    %v125 = vld [vmem:[#allocation9] sm:$0xff]
    %v126 = vadd.f32 %v123, %v124
    %v127 = vadd.f32 %v125, %v126
    %128 = vst [vmem:[#allocation9] sm:$0xff] %v127
    // Predicated region
    $region30: #{tpu_custom_call.1} parent=1 // pred_check
      _
    $region31: #{tpu_custom_call.1} parent=1 // pred_check_branch
      %130 = sbr.rel (0) target = $region33
    $region32: #{tpu_custom_call.1} parent=1 // pred_region
      %s132 = ssub.s32 128, 128
      %133 = vsyncadd [#allocation4], %s132
      %s135 = sshll.u32 [#allocation9], 4
      %s136 = int_to_ptr.vmem [resolvable:$true] %s135
      %138 = dma.vmem_to_hbm [thread:$0]  %s136, 128, %s3, [#allocation4]
    $region33: #{tpu_custom_call.1} parent=1 // pred_fallthru
      _
    // Predicated region
    $region34: #{tpu_custom_call.1} parent=1 // pred_check
      _
    $region35: #{tpu_custom_call.1} parent=1 // pred_check_branch
      %140 = sbr.rel (0) target = $region37
    $region36: #{tpu_custom_call.1} parent=1 // pred_region
      %141 = dma.done [#allocation4], 128
    $region37: #{tpu_custom_call.1} parent=1 // pred_fallthru
      _
    %142 = vsyncpa [#allocation3], 1
    %143 = vsyncpa [#allocation8], 1
    %144 = vsyncpa [#allocation4], 1
    %145 = vsyncpa [#allocation5], 1

</llo_original>
